<compile_context>
chip_gen: v7x
topology: tpu7x:2x2x1
jax: 0.10.0
libtpu: 0.0.40
codegen_flags: <defaults>
</compile_context>

<pallas_src>
import functools

import jax
import jax.numpy as jnp
from jax.experimental import pallas as pl
from jax.experimental.pallas import tpu as pltpu


def _round_up(x, m):
    return ((x + m - 1) // m) * m


def mlp_kernel(x_ref, w1_ref, b1_ref, w2_ref, b2_ref, w3_ref, b3_ref, out_ref):
    # X tile arrives as (tb, inDim) f32.  Transpose on the XLU (f32 path),
    # then cast to bf16 on the VPU -> (inDim, tb) feature-major operand.
    xt = jnp.transpose(x_ref[...]).astype(jnp.bfloat16)            # (in, tb)

    # fc_first + ReLU :  H1 = W1 @ X^T   -> (hid, tb), f32 accumulate
    h = jnp.dot(w1_ref[...], xt, preferred_element_type=jnp.float32)
    h = jnp.maximum(h + b1_ref[...], 0.0)

    # middle layer + ReLU :  H2 = W2 @ H1 -> (hid, tb)
    h = jnp.dot(w2_ref[...], h.astype(jnp.bfloat16),
                preferred_element_type=jnp.float32)
    h = jnp.maximum(h + b2_ref[...], 0.0)

    # fc_last (no nonlinearity) :  O^T = W3 @ H2 -> (outDim, tb), lane-dense
    o = jnp.dot(w3_ref[...], h.astype(jnp.bfloat16),
                preferred_element_type=jnp.float32)
    out_ref[...] = (o + b3_ref[...]).astype(out_ref.dtype)


def prepare_params(params):
    """One-time prep: keep PyTorch-convention (out, in) weight layout (the kernel
    computes W @ X^T), cast weights to bf16 for the MXU, reshape biases to
    (out, 1) f32 so they broadcast along the lane (batch) axis."""
    return {
        "w1": params["w1"].astype(jnp.bfloat16),        # (hidden, inputDim)
        "w2": params["w2"].astype(jnp.bfloat16),        # (hidden, hidden)
        "w3": params["w3"].astype(jnp.bfloat16),        # (outputDim, hidden)
        "b1": params["b1"][:, None].astype(jnp.float32),
        "b2": params["b2"][:, None].astype(jnp.float32),
        "b3": params["b3"][:, None].astype(jnp.float32),
    }


@functools.partial(jax.jit, static_argnames=("tile_b",))
def mlp_forward(x, prepared, tile_b=4096):
    """x: (B, inputDim) f32. prepared: output of prepare_params(). Returns (B, outputDim) f32."""
    B, in_dim = x.shape
    w1, w2, w3 = prepared["w1"], prepared["w2"], prepared["w3"]
    b1, b2, b3 = prepared["b1"], prepared["b2"], prepared["b3"]
    hid = w1.shape[0]
    out_dim = w3.shape[0]

    # --- batch tile selection ------------------------------------------------
    # Small B: one full-extent tile (block dims == array dims, no (8,128) issue).
    # Large B: big, 128-aligned tiles (lane-dense output stores), and >= 2 grid
    # steps so v7x's two TensorCores both get work; ragged last tile handled by
    # the grid (no jnp.pad of X on the hot path).
    cap = max(128, (tile_b // 128) * 128)
    if B < 256:
        tb = _round_up(B, 8)
        pad_b = tb                      # tiny pad only for small, odd batches
    else:
        tb = min(cap, _round_up(pl.cdiv(B, 2), 128))
        pad_b = B                       # ragged last block handled by Pallas

    x_in = x if pad_b == B else jnp.pad(x, ((0, pad_b - B), (0, 0)))
    n_tiles = pl.cdiv(pad_b, tb)

    # Weights / biases are tiny: fully VMEM-resident across all grid steps.
    def _resident(a):
        return pl.BlockSpec(a.shape, lambda i: (0, 0))

    flops = 2 * pad_b * (in_dim * hid + hid * hid + hid * out_dim)
    bytes_accessed = (
        pad_b * in_dim * 4              # f32 X read
        + pad_b * out_dim * 4           # f32 out write
        + (w1.size + w2.size + w3.size) * 2
        + (b1.size + b2.size + b3.size) * 4
    )

    out_t = pl.pallas_call(
        mlp_kernel,
        out_shape=jax.ShapeDtypeStruct((out_dim, pad_b), jnp.float32),
        grid_spec=pltpu.PrefetchScalarGridSpec(
            num_scalar_prefetch=0,
            grid=(n_tiles,),
            in_specs=[
                pl.BlockSpec((tb, in_dim), lambda i: (i, 0)),   # stream X tiles
                _resident(w1), _resident(b1),
                _resident(w2), _resident(b2),
                _resident(w3), _resident(b3),
            ],
            # Lane-dense output: batch on the lane axis.
            out_specs=pl.BlockSpec((out_dim, tb), lambda i: (0, i)),
        ),
        compiler_params=pltpu.CompilerParams(
            dimension_semantics=("parallel",),      # shard batch tiles across TCs (v7x)
            vmem_limit_bytes=32 * 1024 * 1024,      # headroom over v5e's 16 MiB default
        ),
        cost_estimate=pl.CostEstimate(
            flops=flops, bytes_accessed=bytes_accessed, transcendentals=0,
        ),
    )(x_in, w1, b1, w2, b2, w3, b3)

    # (outDim, pad_b) -> (B, outDim); this transpose is on the tiny output only.
    return out_t[:, :B].T


def init_params(key, input_dim, output_dim, hidden_dim):
    """PyTorch nn.Linear default init (U[-1/sqrt(fan_in), 1/sqrt(fan_in)]),
    PyTorch convention: W is (out, in), b is (out,)."""
    ks = jax.random.split(key, 6)

    def lin(kw, kb, fan_in, fan_out):
        bound = 1.0 / jnp.sqrt(fan_in)
        w = jax.random.uniform(kw, (fan_out, fan_in), jnp.float32, -bound, bound)
        b = jax.random.uniform(kb, (fan_out,), jnp.float32, -bound, bound)
        return w, b

    w1, b1 = lin(ks[0], ks[1], input_dim, hidden_dim)
    w2, b2 = lin(ks[2], ks[3], hidden_dim, hidden_dim)
    w3, b3 = lin(ks[4], ks[5], hidden_dim, output_dim)
    return {"w1": w1, "b1": b1, "w2": w2, "b2": b2, "w3": w3, "b3": b3}


def mlp_reference_f32(x, p):
    h = jnp.maximum(x @ p["w1"].T + p["b1"], 0.0)
    h = jnp.maximum(h @ p["w2"].T + p["b2"], 0.0)
    return h @ p["w3"].T + p["b3"]


def mlp_reference_bf16(x, prepared):
    """Same numerics as the kernel (bf16 operands, f32 accumulate), batch-major."""
    h = jnp.dot(x.astype(jnp.bfloat16), prepared["w1"].T,
                preferred_element_type=jnp.float32)
    h = jnp.maximum(h + prepared["b1"][:, 0], 0.0)
    h = jnp.dot(h.astype(jnp.bfloat16), prepared["w2"].T,
                preferred_element_type=jnp.float32)
    h = jnp.maximum(h + prepared["b2"][:, 0], 0.0)
    o = jnp.dot(h.astype(jnp.bfloat16), prepared["w3"].T,
                preferred_element_type=jnp.float32)
    return o + prepared["b3"][:, 0]


if __name__ == "__main__":
    key = jax.random.PRNGKey(0)
    k_x, k_p, k_x2 = jax.random.split(key, 3)

    batch, input_dim, hidden_dim, output_dim = 8, 16, 32, 4
    x = jax.random.normal(k_x, (batch, input_dim), jnp.float32)
    params = init_params(k_p, input_dim, output_dim, hidden_dim)
    prepared = prepare_params(params)   # one-time bf16 cast / bias reshape

    # Small-batch (single-tile) path.
    out = jax.block_until_ready(mlp_forward(x, prepared))
    assert out.shape == (batch, output_dim)
    ref_bf16 = mlp_reference_bf16(x, prepared)
    assert jnp.allclose(out, ref_bf16, atol=2e-3, rtol=2e-3), "mismatch vs bf16 reference (small batch)"
    ref_f32 = mlp_reference_f32(x, params)
    assert jnp.allclose(out, ref_f32, atol=8e-2, rtol=8e-2), "mismatch vs f32 reference (small batch)"

    # Multi-tile path with a ragged last block (exercises the streaming grid).
    batch2 = 600
    x2 = jax.random.normal(k_x2, (batch2, input_dim), jnp.float32)
    out2 = jax.block_until_ready(mlp_forward(x2, prepared))
    assert out2.shape == (batch2, output_dim)
    ref2 = mlp_reference_bf16(x2, prepared)
    assert jnp.allclose(out2, ref2, atol=2e-3, rtol=2e-3), "mismatch vs bf16 reference (multi-tile)"

    print("KERNEL_OK")
</pallas_src>

<mosaic_0001>
module attributes {stable_mosaic.version = 11 : i64} {
  func.func @mlp_kernel(%arg0: i32, %arg1: memref<8x16xf32, #tpu.memory_space<vmem>>, %arg2: memref<32x16xbf16, #tpu.memory_space<vmem>>, %arg3: memref<32x1xf32, #tpu.memory_space<vmem>>, %arg4: memref<32x32xbf16, #tpu.memory_space<vmem>>, %arg5: memref<32x1xf32, #tpu.memory_space<vmem>>, %arg6: memref<4x32xbf16, #tpu.memory_space<vmem>>, %arg7: memref<4x1xf32, #tpu.memory_space<vmem>>, %arg8: memref<4x8xf32, #tpu.memory_space<vmem>>) attributes {dimension_semantics = [#tpu.dimension_semantics<parallel>], iteration_bounds = array<i64: 1>, scalar_prefetch = 0 : i64, scratch_operands = 0 : i64, tpu.core_type = #tpu.core_type<tc>, window_params = [{transform_indices = @transform_0, window_bounds = array<i64: 8, 16>}, {pipeline_mode = #tpu.pipeline_mode<synchronous>, transform_indices = @transform_1, window_bounds = array<i64: 32, 16>}, {pipeline_mode = #tpu.pipeline_mode<synchronous>, transform_indices = @transform_2, window_bounds = array<i64: 32, 1>}, {pipeline_mode = #tpu.pipeline_mode<synchronous>, transform_indices = @transform_3, window_bounds = array<i64: 32, 32>}, {pipeline_mode = #tpu.pipeline_mode<synchronous>, transform_indices = @transform_4, window_bounds = array<i64: 32, 1>}, {pipeline_mode = #tpu.pipeline_mode<synchronous>, transform_indices = @transform_5, window_bounds = array<i64: 4, 32>}, {pipeline_mode = #tpu.pipeline_mode<synchronous>, transform_indices = @transform_6, window_bounds = array<i64: 4, 1>}, {transform_indices = @transform_7, window_bounds = array<i64: 4, 8>}]} {
    %c0 = arith.constant 0 : index
    %c0_0 = arith.constant 0 : index
    %0 = vector.load %arg1[%c0, %c0_0] : memref<8x16xf32, #tpu.memory_space<vmem>>, vector<8x16xf32>
    %1 = tpu.transpose %0, [1, 0] : vector<8x16xf32> -> vector<16x8xf32>
    %2 = arith.truncf %1 : vector<16x8xf32> to vector<16x8xbf16>
    %c0_1 = arith.constant 0 : index
    %c0_2 = arith.constant 0 : index
    %3 = vector.load %arg2[%c0_1, %c0_2] : memref<32x16xbf16, #tpu.memory_space<vmem>>, vector<32x16xbf16>
    %cst = arith.constant dense<0.000000e+00> : vector<32x8xf32>
    %4 = tpu.matmul %3, %2, %cst {dimension_numbers = #tpu.dot_dimension_numbers<[1], [0], [0], [1], [0, 0, 1, 1], [], []>} : vector<32x16xbf16>, vector<16x8xbf16>, vector<32x8xf32> -> vector<32x8xf32>
    %c0_3 = arith.constant 0 : index
    %c0_4 = arith.constant 0 : index
    %5 = vector.load %arg3[%c0_3, %c0_4] : memref<32x1xf32, #tpu.memory_space<vmem>>, vector<32x1xf32>
    %6 = vector.broadcast %5 : vector<32x1xf32> to vector<32x8xf32>
    %7 = arith.addf %4, %6 : vector<32x8xf32>
    %cst_5 = arith.constant 0.000000e+00 : f32
    %8 = vector.broadcast %cst_5 : f32 to vector<32x8xf32>
    %9 = arith.maximumf %7, %8 : vector<32x8xf32>
    %c0_6 = arith.constant 0 : index
    %c0_7 = arith.constant 0 : index
    %10 = vector.load %arg4[%c0_6, %c0_7] : memref<32x32xbf16, #tpu.memory_space<vmem>>, vector<32x32xbf16>
    %11 = arith.truncf %9 : vector<32x8xf32> to vector<32x8xbf16>
    %cst_8 = arith.constant dense<0.000000e+00> : vector<32x8xf32>
    %12 = tpu.matmul %10, %11, %cst_8 {dimension_numbers = #tpu.dot_dimension_numbers<[1], [0], [0], [1], [0, 0, 1, 1], [], []>} : vector<32x32xbf16>, vector<32x8xbf16>, vector<32x8xf32> -> vector<32x8xf32>
    %c0_9 = arith.constant 0 : index
    %c0_10 = arith.constant 0 : index
    %13 = vector.load %arg5[%c0_9, %c0_10] : memref<32x1xf32, #tpu.memory_space<vmem>>, vector<32x1xf32>
    %14 = vector.broadcast %13 : vector<32x1xf32> to vector<32x8xf32>
    %15 = arith.addf %12, %14 : vector<32x8xf32>
    %cst_11 = arith.constant 0.000000e+00 : f32
    %16 = vector.broadcast %cst_11 : f32 to vector<32x8xf32>
    %17 = arith.maximumf %15, %16 : vector<32x8xf32>
    %c0_12 = arith.constant 0 : index
    %c0_13 = arith.constant 0 : index
    %18 = vector.load %arg6[%c0_12, %c0_13] : memref<4x32xbf16, #tpu.memory_space<vmem>>, vector<4x32xbf16>
    %19 = arith.truncf %17 : vector<32x8xf32> to vector<32x8xbf16>
    %cst_14 = arith.constant dense<0.000000e+00> : vector<4x8xf32>
    %20 = tpu.matmul %18, %19, %cst_14 {dimension_numbers = #tpu.dot_dimension_numbers<[1], [0], [0], [1], [0, 0, 1, 1], [], []>} : vector<4x32xbf16>, vector<32x8xbf16>, vector<4x8xf32> -> vector<4x8xf32>
    %c0_15 = arith.constant 0 : index
    %c0_16 = arith.constant 0 : index
    %21 = vector.load %arg7[%c0_15, %c0_16] : memref<4x1xf32, #tpu.memory_space<vmem>>, vector<4x1xf32>
    %22 = vector.broadcast %21 : vector<4x1xf32> to vector<4x8xf32>
    %23 = arith.addf %20, %22 : vector<4x8xf32>
    %c0_17 = arith.constant 0 : index
    %c0_18 = arith.constant 0 : index
    %24 = vector.load %arg8[%c0_17, %c0_18] : memref<4x8xf32, #tpu.memory_space<vmem>>, vector<4x8xf32>
    tpu.vector_store %arg8[%c0_17, %c0_18], %23 {strides = array<i32>} : memref<4x8xf32, #tpu.memory_space<vmem>>, vector<4x8xf32>,
    return
  }
  func.func @transform_0(%arg0: i32) -> (i32, i32) {
    %c0_i32 = arith.constant 0 : i32
    %c0_i32_0 = arith.constant 0 : i32
    return %arg0, %c0_i32 : i32, i32
  }
  func.func @transform_1(%arg0: i32) -> (i32, i32) {
    %c0_i32 = arith.constant 0 : i32
    %c0_i32_0 = arith.constant 0 : i32
    %c0_i32_1 = arith.constant 0 : i32
    return %c0_i32, %c0_i32_0 : i32, i32
  }
  func.func @transform_2(%arg0: i32) -> (i32, i32) {
    %c0_i32 = arith.constant 0 : i32
    %c0_i32_0 = arith.constant 0 : i32
    %c0_i32_1 = arith.constant 0 : i32
    return %c0_i32, %c0_i32_0 : i32, i32
  }
  func.func @transform_3(%arg0: i32) -> (i32, i32) {
    %c0_i32 = arith.constant 0 : i32
    %c0_i32_0 = arith.constant 0 : i32
    %c0_i32_1 = arith.constant 0 : i32
    return %c0_i32, %c0_i32_0 : i32, i32
  }
  func.func @transform_4(%arg0: i32) -> (i32, i32) {
    %c0_i32 = arith.constant 0 : i32
    %c0_i32_0 = arith.constant 0 : i32
    %c0_i32_1 = arith.constant 0 : i32
    return %c0_i32, %c0_i32_0 : i32, i32
  }
  func.func @transform_5(%arg0: i32) -> (i32, i32) {
    %c0_i32 = arith.constant 0 : i32
    %c0_i32_0 = arith.constant 0 : i32
    %c0_i32_1 = arith.constant 0 : i32
    return %c0_i32, %c0_i32_0 : i32, i32
  }
  func.func @transform_6(%arg0: i32) -> (i32, i32) {
    %c0_i32 = arith.constant 0 : i32
    %c0_i32_0 = arith.constant 0 : i32
    %c0_i32_1 = arith.constant 0 : i32
    return %c0_i32, %c0_i32_0 : i32, i32
  }
  func.func @transform_7(%arg0: i32) -> (i32, i32) {
    %c0_i32 = arith.constant 0 : i32
    %c0_i32_0 = arith.constant 0 : i32
    return %c0_i32, %arg0 : i32, i32
  }
}

</mosaic_0001>

<llo_original>
// kernel: mlp_forward.1
$region0: #{mlp_forward.1}
  #allocation0 [shape = 'u32[]', space=smem, size = 0x4, offset = 0x4, fixed_abs, tag = 'smem constant byte address 0x4 - core index']
  #allocation1 [shape = 'u32[144,128]{1,0:T(1,128)}', space=vmem, size = 0x12000, scoped, tag = 'internal scratch']
  %s0 = inlined_call_operand.vmem [shape: f32[8,16], index: 0, kind: input, shape index: {}]
  %s1 = inlined_call_operand.vmem [shape: bf16[32,16], index: 1, kind: input, shape index: {}]
  %s2 = inlined_call_operand.vmem [shape: f32[32,1], index: 2, kind: input, shape index: {}]
  %s3 = inlined_call_operand.vmem [shape: bf16[32,32], index: 3, kind: input, shape index: {}]
  %s4 = inlined_call_operand.vmem [shape: f32[32,1], index: 4, kind: input, shape index: {}]
  %s5 = inlined_call_operand.vmem [shape: bf16[4,32], index: 5, kind: input, shape index: {}]
  %s6 = inlined_call_operand.vmem [shape: f32[4,1], index: 6, kind: input, shape index: {}]
  %s7 = inlined_call_operand.hbm [shape: f32[4,8], index: 7, kind: output, shape index: {}]
  %s8 = sld [smem:[#allocation0]]
  $region38: #{mlp_forward.1} parent=0
    _
  %s10 = ssub.s32 1, %s8
  %s11 = scalar_select 0, %s10, %s8
  $region1: #{mlp_forward.1} parent=0
    #allocation2 [shape = 'u8[2048]{0}', space=vmem, size = 0x800, scoped, tag = 'output window, operand 0, single buffered']
    #allocation3 [shape = 's32[1]{0}', space=sflag, size = 0x4, scoped, tag = 'scoped memory for mlp_forward.1']
    %12 = vsyncpa [#allocation3], 0
    // Predicated region
    $region2: #{mlp_forward.1} parent=1 // pred_check
      _
    $region3: #{mlp_forward.1} parent=1 // pred_check_branch
      %14 = sbr.rel (0) target = $region5
    $region4: #{mlp_forward.1} parent=1 // pred_region
      _
    $region5: #{mlp_forward.1} parent=1 // pred_fallthru
      _
    // Predicated region
    $region6: #{mlp_forward.1} parent=1 // pred_check
      _
    $region7: #{mlp_forward.1} parent=1 // pred_check_branch
      %16 = sbr.rel (0) target = $region9
    $region8: #{mlp_forward.1} parent=1 // pred_region
      _
    $region9: #{mlp_forward.1} parent=1 // pred_fallthru
      _
    // Predicated region
    $region10: #{mlp_forward.1} parent=1 // pred_check
      _
    $region11: #{mlp_forward.1} parent=1 // pred_check_branch
      %18 = sbr.rel (0) target = $region13
    $region12: #{mlp_forward.1} parent=1 // pred_region
      _
    $region13: #{mlp_forward.1} parent=1 // pred_fallthru
      _
    // Predicated region
    $region14: #{mlp_forward.1} parent=1 // pred_check
      _
    $region15: #{mlp_forward.1} parent=1 // pred_check_branch
      %20 = sbr.rel (0) target = $region17
    $region16: #{mlp_forward.1} parent=1 // pred_region
      _
    $region17: #{mlp_forward.1} parent=1 // pred_fallthru
      _
    // Predicated region
    $region18: #{mlp_forward.1} parent=1 // pred_check
      _
    $region19: #{mlp_forward.1} parent=1 // pred_check_branch
      %22 = sbr.rel (0) target = $region21
    $region20: #{mlp_forward.1} parent=1 // pred_region
      _
    $region21: #{mlp_forward.1} parent=1 // pred_fallthru
      _
    // Predicated region
    $region22: #{mlp_forward.1} parent=1 // pred_check
      _
    $region23: #{mlp_forward.1} parent=1 // pred_check_branch
      %24 = sbr.rel (0) target = $region25
    $region24: #{mlp_forward.1} parent=1 // pred_region
      _
    $region25: #{mlp_forward.1} parent=1 // pred_fallthru
      _
    // Predicated region
    $region26: #{mlp_forward.1} parent=1 // pred_check
      _
    $region27: #{mlp_forward.1} parent=1 // pred_check_branch
      %26 = sbr.rel (0) target = $region29
    $region28: #{mlp_forward.1} parent=1 // pred_region
      _
    $region29: #{mlp_forward.1} parent=1 // pred_fallthru
      _
    %v28 = vld [vmem:[%s0] sm:$0xff]
    %29 = vxpose.xlu0.b32.start [1/16] %v28, 128
    %30 = vxpose.xlu0.b32.cont [2/16] 0.0, 128
    %31 = vxpose.xlu0.b32.cont [3/16] 0.0, 128
    %32 = vxpose.xlu0.b32.cont [4/16] 0.0, 128
    %33 = vxpose.xlu0.b32.cont [5/16] 0.0, 128
    %34 = vxpose.xlu0.b32.cont [6/16] 0.0, 128
    %35 = vxpose.xlu0.b32.cont [7/16] 0.0, 128
    %36 = vxpose.xlu0.b32.cont [8/16] 0.0, 128
    %37 = vxpose.xlu0.b32.cont [9/16] 0.0, 128
    %38 = vxpose.xlu0.b32.cont [10/16] 0.0, 128
    %39 = vxpose.xlu0.b32.cont [11/16] 0.0, 128
    %40 = vxpose.xlu0.b32.cont [12/16] 0.0, 128
    %41 = vxpose.xlu0.b32.cont [13/16] 0.0, 128
    %42 = vxpose.xlu0.b32.cont [14/16] 0.0, 128
    %43 = vxpose.xlu0.b32.cont [15/16] 0.0, 128
    %44 = vxpose.xlu0.b32.end [16/16] 0.0, 128
    %v45 = vpop.trf.xlu0
    %v46 = vpop.trf.xlu0
    %v47 = vpop.trf.xlu0
    %v48 = vpop.trf.xlu0
    %v49 = vpop.trf.xlu0
    %v50 = vpop.trf.xlu0
    %v51 = vpop.trf.xlu0
    %v52 = vpop.trf.xlu0
    %v53 = vpop.trf.xlu0
    %v54 = vpop.trf.xlu0
    %v55 = vpop.trf.xlu0
    %v56 = vpop.trf.xlu0
    %v57 = vpop.trf.xlu0
    %v58 = vpop.trf.xlu0
    %v59 = vpop.trf.xlu0
    %v60 = vpop.trf.xlu0
    %v61 = vpack.c.bf16 %v46, %v45
    %v62 = vld [vmem:[%s1] sm:$0xf]
    %v63 = vld [vmem:[%s1 + $0x4] sm:$0xf]
    %v64 = vld [vmem:[%s1 + $0x8] sm:$0xf]
    %v65 = vld [vmem:[%s1 + $0xc] sm:$0xf]
    %v66 = vld [vmem:[%s2] sm:$0xff]
    %v67 = vld [vmem:[%s2 + $0x8] sm:$0xff]
    %v68 = vld [vmem:[%s2 + $0x10] sm:$0xff]
    %v69 = vld [vmem:[%s2 + $0x18] sm:$0xff]
    %71 = vset.pattern.permute.xlu0 0
    %72 = vperm.xlu0 %71, %v66
    %v73 = vpop.permute.xlu0 %72
    %76 = vset.pattern.permute.xlu0 0
    %77 = vperm.xlu0 %76, %v67
    %v78 = vpop.permute.xlu0 %77
    %81 = vset.pattern.permute.xlu0 0
    %82 = vperm.xlu0 %81, %v68
    %v83 = vpop.permute.xlu0 %82
    %86 = vset.pattern.permute.xlu0 0
    %87 = vperm.xlu0 %86, %v69
    %v88 = vpop.permute.xlu0 %87
    %v94 = vunpack.c.l.b16 %v62
    %v95 = vunpack.c.l.b16 %v63
    %v96 = vunpack.c.l.b16 %v64
    %v97 = vunpack.c.l.b16 %v65
    %v98 = vpack.c.b16 %v95, %v94
    %v99 = vpack.c.b16 %v97, %v96
    %vm100 = vcmask 130048
    %v102 = vsel %vm100, %v98, 0
    %v105 = vsel %vm100, %v99, 0
    %107 = vmatprep.subr.bf16.mxu0 0
    %108 = vmatpush1.bf16.msra.mxu0 %v61
    %109 = vmatprep.subr.bf16.mxu0 0
    %110 = vmatpush1.bf16.msra.mxu0 0
    %111 = vmatprep.subr.bf16.mxu0 0
    %112 = vmatpush1.bf16.msra.mxu0 0
    %113 = vmatprep.subr.bf16.mxu0 0
    %114 = vmatpush1.bf16.msra.mxu0 0
    %115 = vmatprep.subr.bf16.mxu0 0
    %116 = vmatpush1.bf16.msra.mxu0 0
    %117 = vmatprep.subr.bf16.mxu0 0
    %118 = vmatpush1.bf16.msra.mxu0 0
    %119 = vmatprep.subr.bf16.mxu0 0
    %120 = vmatpush1.bf16.msra.mxu0 0
    %121 = vmatprep.subr.bf16.mxu0 0
    %122 = vmatpush1.bf16.msra.mxu0 0
    %123 = vmatprep.subr.bf16.mxu0 0
    %124 = vmatpush1.bf16.msra.mxu0 0
    %125 = vmatprep.subr.bf16.mxu0 0
    %126 = vmatpush1.bf16.msra.mxu0 0
    %127 = vmatprep.subr.bf16.mxu0 0
    %128 = vmatpush1.bf16.msra.mxu0 0
    %129 = vmatprep.subr.bf16.mxu0 0
    %130 = vmatpush1.bf16.msra.mxu0 0
    %131 = vmatprep.subr.bf16.mxu0 0
    %132 = vmatpush1.bf16.msra.mxu0 0
    %133 = vmatprep.subr.bf16.mxu0 0
    %134 = vmatpush1.bf16.msra.mxu0 0
    %135 = vmatprep.subr.bf16.mxu0 0
    %136 = vmatpush1.bf16.msra.mxu0 0
    %137 = vmatprep.subr.bf16.mxu0 0
    %138 = vmatpush1.bf16.msra.mxu0 0
    %139 = vmatprep.mubr.bf16.mxu0 0
    %140 = vmatmul.mubr.bf16.gmra.mrb[0].mxu0 %v102
    %v141 = vpop.f32.mrb[0].mxu0
    %v142 = vadd.f32 %v73, %v141
    %v143 = vpop.f32.mrb[0].mxu0
    %v144 = vpop.f32.mrb[0].mxu0
    %v145 = vadd.f32 %v78, %v144
    %v146 = vpop.f32.mrb[0].mxu0
    %147 = vmatprep.mubr.bf16.mxu0 0
    %148 = vmatmul.mubr.bf16.gmra.mrb[0].mxu0 %v105
    %v149 = vpop.f32.mrb[0].mxu0
    %v150 = vadd.f32 %v83, %v149
    %v151 = vpop.f32.mrb[0].mxu0
    %v152 = vpop.f32.mrb[0].mxu0
    %v153 = vadd.f32 %v88, %v152
    %v154 = vpop.f32.mrb[0].mxu0
    %155 = vdwg.mxu0
    %v156 = vmax.f32 %v142, 0.0
    %v157 = vmax.f32 %v145, 0.0
    %v158 = vmax.f32 %v150, 0.0
    %v159 = vmax.f32 %v153, 0.0
    %v160 = vld [vmem:[%s3] sm:$0xf]
    %v161 = vld [vmem:[%s3 + $0x4] sm:$0xf]
    %v162 = vld [vmem:[%s3 + $0x8] sm:$0xf]
    %v163 = vld [vmem:[%s3 + $0xc] sm:$0xf]
    %v164 = vpack.c.bf16 %v157, %v156
    %v165 = vpack.c.bf16 %v159, %v158
    %v166 = vld [vmem:[%s4] sm:$0xff]
    %v167 = vld [vmem:[%s4 + $0x8] sm:$0xff]
    %v168 = vld [vmem:[%s4 + $0x10] sm:$0xff]
    %v169 = vld [vmem:[%s4 + $0x18] sm:$0xff]
    %171 = vset.pattern.permute.xlu0 0
    %172 = vperm.xlu0 %171, %v166
    %v173 = vpop.permute.xlu0 %172
    %176 = vset.pattern.permute.xlu0 0
    %177 = vperm.xlu0 %176, %v167
    %v178 = vpop.permute.xlu0 %177
    %181 = vset.pattern.permute.xlu0 0
    %182 = vperm.xlu0 %181, %v168
    %v183 = vpop.permute.xlu0 %182
    %186 = vset.pattern.permute.xlu0 0
    %187 = vperm.xlu0 %186, %v169
    %v188 = vpop.permute.xlu0 %187
    %v194 = vunpack.c.l.b16 %v160
    %v195 = vunpack.c.l.b16 %v161
    %v196 = vunpack.c.l.b16 %v162
    %v197 = vunpack.c.l.b16 %v163
    %v198 = vpack.c.b16 %v195, %v194
    %v199 = vpack.c.b16 %v197, %v196
    %vm200 = vcmask 261120
    %v202 = vsel %vm200, %v198, 0
    %v205 = vsel %vm200, %v199, 0
    %207 = vmatprep.subr.bf16.mxu0 0
    %208 = vmatpush1.bf16.msra.mxu0 %v164
    %209 = vmatprep.subr.bf16.mxu0 0
    %210 = vmatpush1.bf16.msra.mxu0 %v165
    %211 = vmatprep.subr.bf16.mxu0 0
    %212 = vmatpush1.bf16.msra.mxu0 0
    %213 = vmatprep.subr.bf16.mxu0 0
    %214 = vmatpush1.bf16.msra.mxu0 0
    %215 = vmatprep.subr.bf16.mxu0 0
    %216 = vmatpush1.bf16.msra.mxu0 0
    %217 = vmatprep.subr.bf16.mxu0 0
    %218 = vmatpush1.bf16.msra.mxu0 0
    %219 = vmatprep.subr.bf16.mxu0 0
    %220 = vmatpush1.bf16.msra.mxu0 0
    %221 = vmatprep.subr.bf16.mxu0 0
    %222 = vmatpush1.bf16.msra.mxu0 0
    %223 = vmatprep.subr.bf16.mxu0 0
    %224 = vmatpush1.bf16.msra.mxu0 0
    %225 = vmatprep.subr.bf16.mxu0 0
    %226 = vmatpush1.bf16.msra.mxu0 0
    %227 = vmatprep.subr.bf16.mxu0 0
    %228 = vmatpush1.bf16.msra.mxu0 0
    %229 = vmatprep.subr.bf16.mxu0 0
    %230 = vmatpush1.bf16.msra.mxu0 0
    %231 = vmatprep.subr.bf16.mxu0 0
    %232 = vmatpush1.bf16.msra.mxu0 0
    %233 = vmatprep.subr.bf16.mxu0 0
    %234 = vmatpush1.bf16.msra.mxu0 0
    %235 = vmatprep.subr.bf16.mxu0 0
    %236 = vmatpush1.bf16.msra.mxu0 0
    %237 = vmatprep.subr.bf16.mxu0 0
    %238 = vmatpush1.bf16.msra.mxu0 0
    %239 = vmatprep.mubr.bf16.mxu0 0
    %240 = vmatmul.mubr.bf16.gmra.mrb[0].mxu0 %v202
    %v241 = vpop.f32.mrb[0].mxu0
    %v242 = vadd.f32 %v173, %v241
    %v243 = vpop.f32.mrb[0].mxu0
    %v244 = vpop.f32.mrb[0].mxu0
    %v245 = vadd.f32 %v178, %v244
    %v246 = vpop.f32.mrb[0].mxu0
    %247 = vmatprep.mubr.bf16.mxu0 0
    %248 = vmatmul.mubr.bf16.gmra.mrb[0].mxu0 %v205
    %v249 = vpop.f32.mrb[0].mxu0
    %v250 = vadd.f32 %v183, %v249
    %v251 = vpop.f32.mrb[0].mxu0
    %v252 = vpop.f32.mrb[0].mxu0
    %v253 = vadd.f32 %v188, %v252
    %v254 = vpop.f32.mrb[0].mxu0
    %255 = vdwg.mxu0
    %v256 = vmax.f32 %v242, 0.0
    %v257 = vmax.f32 %v245, 0.0
    %v258 = vmax.f32 %v250, 0.0
    %v259 = vmax.f32 %v253, 0.0
    %v260 = vld [vmem:[%s5] sm:$0x3]
    %v261 = vpack.c.bf16 %v257, %v256
    %v262 = vpack.c.bf16 %v259, %v258
    %v263 = vld [vmem:[%s6] sm:$0xf]
    %265 = vset.pattern.permute.xlu0 0
    %266 = vperm.xlu0 %265, %v263
    %v267 = vpop.permute.xlu0 %266
    %v270 = vsel %vm200, %v260, 0
    %272 = vmatprep.subr.bf16.mxu0 0
    %273 = vmatpush1.bf16.msra.mxu0 %v261
    %274 = vmatprep.subr.bf16.mxu0 0
    %275 = vmatpush1.bf16.msra.mxu0 %v262
    %276 = vmatprep.subr.bf16.mxu0 0
    %277 = vmatpush1.bf16.msra.mxu0 0
    %278 = vmatprep.subr.bf16.mxu0 0
    %279 = vmatpush1.bf16.msra.mxu0 0
    %280 = vmatprep.subr.bf16.mxu0 0
    %281 = vmatpush1.bf16.msra.mxu0 0
    %282 = vmatprep.subr.bf16.mxu0 0
    %283 = vmatpush1.bf16.msra.mxu0 0
    %284 = vmatprep.subr.bf16.mxu0 0
    %285 = vmatpush1.bf16.msra.mxu0 0
    %286 = vmatprep.subr.bf16.mxu0 0
    %287 = vmatpush1.bf16.msra.mxu0 0
    %288 = vmatprep.subr.bf16.mxu0 0
    %289 = vmatpush1.bf16.msra.mxu0 0
    %290 = vmatprep.subr.bf16.mxu0 0
    %291 = vmatpush1.bf16.msra.mxu0 0
    %292 = vmatprep.subr.bf16.mxu0 0
    %293 = vmatpush1.bf16.msra.mxu0 0
    %294 = vmatprep.subr.bf16.mxu0 0
    %295 = vmatpush1.bf16.msra.mxu0 0
    %296 = vmatprep.subr.bf16.mxu0 0
    %297 = vmatpush1.bf16.msra.mxu0 0
    %298 = vmatprep.subr.bf16.mxu0 0
    %299 = vmatpush1.bf16.msra.mxu0 0
    %300 = vmatprep.subr.bf16.mxu0 0
    %301 = vmatpush1.bf16.msra.mxu0 0
    %302 = vmatprep.subr.bf16.mxu0 0
    %303 = vmatpush1.bf16.msra.mxu0 0
    %304 = vmatprep.mubr.bf16.mxu0 0
    %305 = vmatmul.mubr.bf16.gmra.mrb[0].mxu0 %v270
    %v306 = vpop.f32.mrb[0].mxu0
    %v307 = vadd.f32 %v267, %v306
    %v308 = vpop.f32.mrb[0].mxu0
    %v309 = vpop.f32.mrb[0].mxu0
    %v310 = vpop.f32.mrb[0].mxu0
    %311 = vdwg.mxu0
    %vm312 = vcmask 60416
    %313 = vst.msk [vmem:[#allocation2] sm:$0xf] %vm312, %v307
    // Predicated region
    $region30: #{mlp_forward.1} parent=1 // pred_check
      _
    $region31: #{mlp_forward.1} parent=1 // pred_check_branch
      %315 = sbr.rel (0) target = $region33
    $region32: #{mlp_forward.1} parent=1 // pred_region
      %s317 = ssub.s32 64, 64
      %318 = vsyncadd [#allocation3], %s317
      %s320 = sshll.u32 [#allocation2], 4
      %s321 = int_to_ptr.vmem [resolvable:$true] %s320
      %323 = dma.vmem_to_hbm [thread:$0]  %s321, 64, %s7, [#allocation3]
    $region33: #{mlp_forward.1} parent=1 // pred_fallthru
      _
    // Predicated region
    $region34: #{mlp_forward.1} parent=1 // pred_check
      _
    $region35: #{mlp_forward.1} parent=1 // pred_check_branch
      %325 = sbr.rel (0) target = $region37
    $region36: #{mlp_forward.1} parent=1 // pred_region
      %326 = dma.done [#allocation3], 64
    $region37: #{mlp_forward.1} parent=1 // pred_fallthru
      _
    %327 = vsyncpa [#allocation3], 1

</llo_original>
